<compile_context>
chip_gen: v6e
topology: v6e:2x2x1
jax: 0.10.0
libtpu: 0.0.40
codegen_flags: <defaults>
</compile_context>

<pallas_src>
import functools

import jax
import jax.numpy as jnp
from jax.experimental import pallas as pl
from jax.experimental.pallas import tpu as pltpu

_LANES = 128
# 3 outputs * 2 buffers * 4096 * 128 * 4 B = 12 MiB (< v5e's 16 MiB default
# scoped VMEM, well under v6e/v7x's 32 MiB default).
_MAX_BLOCK_ROWS = 4096
# Below this many folded rows a single grid step is cheapest everywhere.
_SPLIT_MIN_ROWS = 1024


def _round_up(x, m):
    return ((x + m - 1) // m) * m


def _choose_block_rows(R, max_block_rows):
    """Pick the folded-row tile size.

    * As large as possible (amortize ~0.35 us per-step overhead), capped at
      max_block_rows for VMEM.
    * For large R, keep an even step count >= 2 so v7x's two TensorCores can
      split the writeback under the "parallel" batch axis (no-op on v5e/v6e).
    * The result is a multiple of 8 sublanes unless it equals the full extent
      R (both satisfy the (8, 128) block constraint).
    """
    max_block_rows = max(8, (max_block_rows // 8) * 8)
    if R <= min(max_block_rows, _SPLIT_MIN_ROWS):
        return R  # single full-extent block
    steps = max(2, pl.cdiv(R, max_block_rows))
    if steps % 2:
        steps += 1  # even step count -> balanced megacore split on v7x
    return min(_round_up(pl.cdiv(R, steps), 8), max_block_rows)


def _gmm_kernel(pi_row_ref, mu_row_ref, sg_row_ref,
                pi_out_ref, mu_out_ref, sg_out_ref):
    # *_row_ref : (1, W) resident, already softmaxed / exp'd / lane-tiled.
    # *_out_ref : (BR, W) lane-dense output slab.
    # Pure broadcast + full-width stores: the vst/DMA slot is the only work.
    shape = pi_out_ref.shape
    pi_out_ref[...] = jnp.broadcast_to(pi_row_ref[...], shape).astype(pi_out_ref.dtype)
    mu_out_ref[...] = jnp.broadcast_to(mu_row_ref[...], shape).astype(mu_out_ref.dtype)
    sg_out_ref[...] = jnp.broadcast_to(sg_row_ref[...], shape).astype(sg_out_ref.dtype)


def gmm_forward(like, pi, mu, sigma, *, max_block_rows=_MAX_BLOCK_ROWS):
    """Pallas equivalent of GMM.forward(like)."""
    B = like.shape[0]
    K = pi.shape[-1]
    out_dtype = pi.dtype  # float32 to match torch; bf16 would halve HBM bytes.

    # Fold consecutive batch rows into the lane axis:
    #   (B, K) row-major  ==  (R, fold*K)   with fold = 128 // K rows per slab row.
    fold = max(1, _LANES // K)
    W = fold * K
    R = pl.cdiv(B, fold)
    block_rows = _choose_block_rows(R, max_block_rows)
    grid = (pl.cdiv(R, block_rows),)

    # O(K) parameter transform hoisted out of the kernel (exact softmax, no
    # approximate reciprocal), pre-tiled `fold` times along the lane axis so
    # every in-kernel store is a full-width, unmasked vst.
    pi_row = jnp.tile(jax.nn.softmax(pi.astype(jnp.float32), axis=-1),
                      (1, fold)).astype(out_dtype)                    # (1, W)
    mu_row = jnp.tile(mu.astype(jnp.float32), (1, fold)).astype(out_dtype)
    sg_row = jnp.tile(jnp.exp(sigma.astype(jnp.float32)), (1, fold)).astype(out_dtype)

    out_sds = jax.ShapeDtypeStruct((R, W), out_dtype)
    param_spec = pl.BlockSpec((1, W), lambda i: (0, 0))      # stays resident
    out_spec = pl.BlockSpec((block_rows, W), lambda i: (i, 0))

    # Default scoped-VMEM limits cover the default tile (12 MiB double-buffered
    # even on v5e).  Only set an explicit limit if a caller asks for more.
    itemsize = jnp.dtype(out_dtype).itemsize
    dbuf_bytes = 3 * 2 * block_rows * W * itemsize
    cp_kwargs = dict(dimension_semantics=("parallel",))
    if dbuf_bytes > (14 << 20):
        cp_kwargs["vmem_limit_bytes"] = dbuf_bytes + (2 << 20)

    pi_f, mu_f, sg_f = pl.pallas_call(
        _gmm_kernel,
        out_shape=(out_sds, out_sds, out_sds),
        grid=grid,
        in_specs=[param_spec, param_spec, param_spec],
        out_specs=(out_spec, out_spec, out_spec),
        compiler_params=pltpu.CompilerParams(**cp_kwargs),
    )(pi_row, mu_row, sg_row)

    def unfold(x):
        x = x.reshape(R * fold, K)          # free metadata reshape
        if R * fold == B:
            return x
        # NOTE: when B % fold != 0 this leading-dim slice materializes a copy
        # in XLA.  Callers that pad B to a multiple of `fold` (16 for K=8), or
        # that can consume the padded (R*fold, K) buffer, avoid that traffic.
        return x[:B]

    return unfold(pi_f), unfold(mu_f), unfold(sg_f)


def make_params(n_gaussians, key):
    """Deterministic parameter init mirroring GMM.__init__."""
    pi = jnp.ones((1, n_gaussians), jnp.float32)                    # torch.ones
    mu = jax.random.normal(key, (1, n_gaussians), jnp.float32)      # .normal_()
    sigma = jnp.ones((1, n_gaussians), jnp.float32)                 # torch.ones
    return pi, mu, sigma


if __name__ == "__main__":
    key = jax.random.PRNGKey(0)
    k_mu, k_like = jax.random.split(key)

    n_gaussians = 8
    batch = 2

    pi, mu, sigma = make_params(n_gaussians, k_mu)
    # `like` only contributes its batch dimension.
    like = jax.random.normal(k_like, (batch, 16), jnp.float32)

    pi_out, mu_out, sigma_out = gmm_forward(like, pi, mu, sigma)
    jax.block_until_ready((pi_out, mu_out, sigma_out))

    # Reference check in plain JAX (softmax is now exact -> tight tolerances).
    sm_ref = jax.nn.softmax(pi, axis=-1)

    def check(B, pi_o, mu_o, sg_o):
        assert pi_o.shape == (B, n_gaussians)
        assert mu_o.shape == (B, n_gaussians)
        assert sg_o.shape == (B, n_gaussians)
        assert jnp.allclose(pi_o, jnp.broadcast_to(sm_ref, (B, n_gaussians)),
                            rtol=1e-6, atol=1e-6)
        assert jnp.allclose(mu_o, jnp.broadcast_to(mu, (B, n_gaussians)),
                            rtol=1e-6, atol=1e-6)
        assert jnp.allclose(sg_o, jnp.broadcast_to(jnp.exp(sigma), (B, n_gaussians)),
                            rtol=1e-5, atol=1e-6)

    check(batch, pi_out, mu_out, sigma_out)

    # Second small case: exercises a multi-step grid, a partial edge block and
    # the batch-padding slice path (300 % 16 != 0) while staying tiny.
    batch2 = 300
    like2 = jnp.zeros((batch2, 16), jnp.float32)
    outs2 = gmm_forward(like2, pi, mu, sigma, max_block_rows=8)
    jax.block_until_ready(outs2)
    check(batch2, *outs2)

    # Third case: large enough batch to hit the even >=2-step split path
    # (R = 512 folded rows, padded batch -> slice-free unfold).
    batch3 = 512 * 16
    like3 = jnp.zeros((batch3, 16), jnp.float32)
    outs3 = gmm_forward(like3, pi, mu, sigma, max_block_rows=256)
    jax.block_until_ready(outs3)
    check(batch3, *outs3)

    print("KERNEL_OK")
</pallas_src>

<mosaic_0001>
module attributes {stable_mosaic.version = 11 : i64} {
  func.func @_gmm_kernel(%arg0: i32, %arg1: memref<1x128xf32, #tpu.memory_space<vmem>>, %arg2: memref<1x128xf32, #tpu.memory_space<vmem>>, %arg3: memref<1x128xf32, #tpu.memory_space<vmem>>, %arg4: memref<1x128xf32, #tpu.memory_space<vmem>>, %arg5: memref<1x128xf32, #tpu.memory_space<vmem>>, %arg6: memref<1x128xf32, #tpu.memory_space<vmem>>) attributes {dimension_semantics = [#tpu.dimension_semantics<parallel>], iteration_bounds = array<i64: 1>, scalar_prefetch = 0 : i64, scratch_operands = 0 : i64, tpu.core_type = #tpu.core_type<tc>, window_params = [{pipeline_mode = #tpu.pipeline_mode<synchronous>, transform_indices = @transform_0, window_bounds = array<i64: 1, 128>}, {pipeline_mode = #tpu.pipeline_mode<synchronous>, transform_indices = @transform_1, window_bounds = array<i64: 1, 128>}, {pipeline_mode = #tpu.pipeline_mode<synchronous>, transform_indices = @transform_2, window_bounds = array<i64: 1, 128>}, {transform_indices = @transform_3, window_bounds = array<i64: 1, 128>}, {transform_indices = @transform_4, window_bounds = array<i64: 1, 128>}, {transform_indices = @transform_5, window_bounds = array<i64: 1, 128>}]} {
    %c0 = arith.constant 0 : index
    %c0_0 = arith.constant 0 : index
    %0 = vector.load %arg1[%c0, %c0_0] : memref<1x128xf32, #tpu.memory_space<vmem>>, vector<1x128xf32>
    %c0_1 = arith.constant 0 : index
    %c0_2 = arith.constant 0 : index
    %1 = vector.load %arg4[%c0_1, %c0_2] : memref<1x128xf32, #tpu.memory_space<vmem>>, vector<1x128xf32>
    tpu.vector_store %arg4[%c0_1, %c0_2], %0 {strides = array<i32>} : memref<1x128xf32, #tpu.memory_space<vmem>>, vector<1x128xf32>,
    %c0_3 = arith.constant 0 : index
    %c0_4 = arith.constant 0 : index
    %2 = vector.load %arg2[%c0_3, %c0_4] : memref<1x128xf32, #tpu.memory_space<vmem>>, vector<1x128xf32>
    %c0_5 = arith.constant 0 : index
    %c0_6 = arith.constant 0 : index
    %3 = vector.load %arg5[%c0_5, %c0_6] : memref<1x128xf32, #tpu.memory_space<vmem>>, vector<1x128xf32>
    tpu.vector_store %arg5[%c0_5, %c0_6], %2 {strides = array<i32>} : memref<1x128xf32, #tpu.memory_space<vmem>>, vector<1x128xf32>,
    %c0_7 = arith.constant 0 : index
    %c0_8 = arith.constant 0 : index
    %4 = vector.load %arg3[%c0_7, %c0_8] : memref<1x128xf32, #tpu.memory_space<vmem>>, vector<1x128xf32>
    %c0_9 = arith.constant 0 : index
    %c0_10 = arith.constant 0 : index
    %5 = vector.load %arg6[%c0_9, %c0_10] : memref<1x128xf32, #tpu.memory_space<vmem>>, vector<1x128xf32>
    tpu.vector_store %arg6[%c0_9, %c0_10], %4 {strides = array<i32>} : memref<1x128xf32, #tpu.memory_space<vmem>>, vector<1x128xf32>,
    return
  }
  func.func @transform_0(%arg0: i32) -> (i32, i32) {
    %c0_i32 = arith.constant 0 : i32
    %c0_i32_0 = arith.constant 0 : i32
    %c0_i32_1 = arith.constant 0 : i32
    return %c0_i32, %c0_i32_0 : i32, i32
  }
  func.func @transform_1(%arg0: i32) -> (i32, i32) {
    %c0_i32 = arith.constant 0 : i32
    %c0_i32_0 = arith.constant 0 : i32
    %c0_i32_1 = arith.constant 0 : i32
    return %c0_i32, %c0_i32_0 : i32, i32
  }
  func.func @transform_2(%arg0: i32) -> (i32, i32) {
    %c0_i32 = arith.constant 0 : i32
    %c0_i32_0 = arith.constant 0 : i32
    %c0_i32_1 = arith.constant 0 : i32
    return %c0_i32, %c0_i32_0 : i32, i32
  }
  func.func @transform_3(%arg0: i32) -> (i32, i32) {
    %c0_i32 = arith.constant 0 : i32
    %c0_i32_0 = arith.constant 0 : i32
    return %arg0, %c0_i32 : i32, i32
  }
  func.func @transform_4(%arg0: i32) -> (i32, i32) {
    %c0_i32 = arith.constant 0 : i32
    %c0_i32_0 = arith.constant 0 : i32
    return %arg0, %c0_i32 : i32, i32
  }
  func.func @transform_5(%arg0: i32) -> (i32, i32) {
    %c0_i32 = arith.constant 0 : i32
    %c0_i32_0 = arith.constant 0 : i32
    return %arg0, %c0_i32 : i32, i32
  }
}

</mosaic_0001>

<llo_original>
// kernel: tpu_custom_call.1
$region0: #{tpu_custom_call.1}
  #allocation0 [shape = 'u32[]', space=smem, size = 0x4, offset = 0x4, fixed_abs, tag = 'smem constant byte address 0x4 - core index']
  #allocation1 [shape = 'u32[144,128]{1,0:T(1,128)}', space=vmem, size = 0x12000, scoped, tag = 'internal scratch']
  %s0 = inlined_call_operand.hbm [shape: f32[1,128], index: 0, kind: input, shape index: {}]
  %s1 = inlined_call_operand.vmem [shape: f32[1,128], index: 1, kind: input, shape index: {}]
  %s2 = inlined_call_operand.vmem [shape: f32[1,128], index: 2, kind: input, shape index: {}]
  %s3 = inlined_call_operand.hbm [shape: f32[1,128], index: 3, kind: output, shape index: {0}]
  %s4 = inlined_call_operand.hbm [shape: f32[1,128], index: 4, kind: output, shape index: {1}]
  %s5 = inlined_call_operand.hbm [shape: f32[1,128], index: 5, kind: output, shape index: {2}]
  %6 = xla_tuple %s3, %s4, %s5
  %s7 = sld [smem:[#allocation0]]
  $region42: #{tpu_custom_call.1} parent=0
    _
  %s9 = ssub.s32 1, %s7
  %s10 = scalar_select 0, %s9, %s7
  $region1: #{tpu_custom_call.1} parent=0
    #allocation2 [shape = 'u8[512]{0}', space=vmem, size = 0x400, scoped, tag = 'input window, operand 0, single buffered']
    #allocation3 [shape = 's32[1]{0}', space=sflag, size = 0x4, scoped, tag = 'scoped memory for tpu_custom_call.1']
    #allocation4 [shape = 's32[1]{0}', space=sflag, size = 0x4, scoped, tag = 'scoped memory for tpu_custom_call.1']
    #allocation5 [shape = 'u8[512]{0}', space=vmem, size = 0x400, scoped, tag = 'output window, operand 0, single buffered']
    #allocation6 [shape = 'u8[512]{0}', space=vmem, size = 0x400, scoped, tag = 'output window, operand 1, single buffered']
    #allocation7 [shape = 's32[1]{0}', space=sflag, size = 0x4, scoped, tag = 'scoped memory for tpu_custom_call.1']
    #allocation8 [shape = 'u8[512]{0}', space=vmem, size = 0x400, scoped, tag = 'output window, operand 2, single buffered']
    %11 = vsyncpa [#allocation3], 0
    %12 = vsyncpa [#allocation4], 0
    %13 = vsyncpa [#allocation7], 0
    // Predicated region
    $region2: #{tpu_custom_call.1} parent=1 // pred_check
      _
    $region3: #{tpu_custom_call.1} parent=1 // pred_check_branch
      %15 = sbr.rel (0) target = $region5
    $region4: #{tpu_custom_call.1} parent=1 // pred_region
      %s17 = ssub.s32 16, 16
      %18 = vsyncadd [#allocation3], %s17
      %s20 = sshll.u32 [#allocation2], 4
      %s21 = int_to_ptr.vmem [resolvable:$true] %s20
      %23 = dma.hbm_to_vmem [thread:$0]  %s0, 16, %s21, [#allocation3]
    $region5: #{tpu_custom_call.1} parent=1 // pred_fallthru
      _
    // Predicated region
    $region6: #{tpu_custom_call.1} parent=1 // pred_check
      _
    $region7: #{tpu_custom_call.1} parent=1 // pred_check_branch
      %25 = sbr.rel (0) target = $region9
    $region8: #{tpu_custom_call.1} parent=1 // pred_region
      _
    $region9: #{tpu_custom_call.1} parent=1 // pred_fallthru
      _
    // Predicated region
    $region10: #{tpu_custom_call.1} parent=1 // pred_check
      _
    $region11: #{tpu_custom_call.1} parent=1 // pred_check_branch
      %27 = sbr.rel (0) target = $region13
    $region12: #{tpu_custom_call.1} parent=1 // pred_region
      _
    $region13: #{tpu_custom_call.1} parent=1 // pred_fallthru
      _
    // Predicated region
    $region14: #{tpu_custom_call.1} parent=1 // pred_check
      _
    $region15: #{tpu_custom_call.1} parent=1 // pred_check_branch
      %29 = sbr.rel (0) target = $region17
    $region16: #{tpu_custom_call.1} parent=1 // pred_region
      %30 = dma.done [#allocation3], 16
    $region17: #{tpu_custom_call.1} parent=1 // pred_fallthru
      _
    %v31 = vld [vmem:[#allocation2] sm:$0x1]
    %32 = vst [vmem:[#allocation5] sm:$0x1] %v31
    %v33 = vld [vmem:[%s1] sm:$0x1]
    %34 = vst [vmem:[#allocation6] sm:$0x1] %v33
    %v35 = vld [vmem:[%s2] sm:$0x1]
    %36 = vst [vmem:[#allocation8] sm:$0x1] %v35
    // Predicated region
    $region18: #{tpu_custom_call.1} parent=1 // pred_check
      _
    $region19: #{tpu_custom_call.1} parent=1 // pred_check_branch
      %38 = sbr.rel (0) target = $region21
    $region20: #{tpu_custom_call.1} parent=1 // pred_region
      %s40 = ssub.s32 16, 16
      %41 = vsyncadd [#allocation4], %s40
      %s43 = sshll.u32 [#allocation5], 4
      %s44 = int_to_ptr.vmem [resolvable:$true] %s43
      %46 = dma.vmem_to_hbm [thread:$0]  %s44, 16, %s3, [#allocation4]
    $region21: #{tpu_custom_call.1} parent=1 // pred_fallthru
      _
    // Predicated region
    $region22: #{tpu_custom_call.1} parent=1 // pred_check
      _
    $region23: #{tpu_custom_call.1} parent=1 // pred_check_branch
      %48 = sbr.rel (0) target = $region25
    $region24: #{tpu_custom_call.1} parent=1 // pred_region
      %s50 = ssub.s32 16, 16
      %51 = vsyncadd [#allocation7], %s50
      %s53 = sshll.u32 [#allocation6], 4
      %s54 = int_to_ptr.vmem [resolvable:$true] %s53
      %56 = dma.vmem_to_hbm [thread:$0]  %s54, 16, %s4, [#allocation7]
    $region25: #{tpu_custom_call.1} parent=1 // pred_fallthru
      _
    // Predicated region
    $region26: #{tpu_custom_call.1} parent=1 // pred_check
      _
    $region27: #{tpu_custom_call.1} parent=1 // pred_check_branch
      %58 = sbr.rel (0) target = $region29
    $region28: #{tpu_custom_call.1} parent=1 // pred_region
      %s60 = ssub.s32 16, 16
      %61 = vsyncadd [#allocation7], %s60
      %s63 = sshll.u32 [#allocation8], 4
      %s64 = int_to_ptr.vmem [resolvable:$true] %s63
      %66 = dma.vmem_to_hbm [thread:$0]  %s64, 16, %s5, [#allocation7]
    $region29: #{tpu_custom_call.1} parent=1 // pred_fallthru
      _
    // Predicated region
    $region30: #{tpu_custom_call.1} parent=1 // pred_check
      _
    $region31: #{tpu_custom_call.1} parent=1 // pred_check_branch
      %68 = sbr.rel (0) target = $region33
    $region32: #{tpu_custom_call.1} parent=1 // pred_region
      %69 = dma.done [#allocation4], 16
    $region33: #{tpu_custom_call.1} parent=1 // pred_fallthru
      _
    // Predicated region
    $region34: #{tpu_custom_call.1} parent=1 // pred_check
      _
    $region35: #{tpu_custom_call.1} parent=1 // pred_check_branch
      %71 = sbr.rel (0) target = $region37
    $region36: #{tpu_custom_call.1} parent=1 // pred_region
      %72 = dma.done [#allocation7], 16
    $region37: #{tpu_custom_call.1} parent=1 // pred_fallthru
      _
    // Predicated region
    $region38: #{tpu_custom_call.1} parent=1 // pred_check
      _
    $region39: #{tpu_custom_call.1} parent=1 // pred_check_branch
      %74 = sbr.rel (0) target = $region41
    $region40: #{tpu_custom_call.1} parent=1 // pred_region
      %75 = dma.done [#allocation7], 16
    $region41: #{tpu_custom_call.1} parent=1 // pred_fallthru
      _
    %76 = vsyncpa [#allocation3], 1
    %77 = vsyncpa [#allocation4], 1
    %78 = vsyncpa [#allocation7], 1

</llo_original>
